<compile_context>
chip_gen: v7x
topology: tpu7x:2x2x1
jax: 0.10.0
libtpu: 0.0.40
codegen_flags: <defaults>
</compile_context>

<pallas_src>
import math

import jax
import jax.numpy as jnp
from jax.experimental import pallas as pl
from jax.experimental.pallas import tpu as pltpu

LANE = 128           # vreg lane width: last block dim is always 128
_ROW_QUANTUM = 64    # row-tile quantum; multiple of 8 sublanes for every dtype


# ----------------------------------------------------------------------------
# Kernel: add a shared pe slab to a (b_blk, rows, 128) tile of x, in fp32.
# ----------------------------------------------------------------------------
def _pe_add_kernel(x_ref, pe_ref, o_ref):
    # x_ref / o_ref: (b_blk, R, 128); pe_ref: (R, 128), broadcast over batch.
    # fp32 add matches the PyTorch fp32 pe buffer + dtype promotion; for fp32
    # inputs the casts are no-ops. Pure VPU work, fully hidden under HBM DMA.
    x = x_ref[...].astype(jnp.float32)
    pe = pe_ref[...].astype(jnp.float32)
    o_ref[...] = (x + pe).astype(o_ref.dtype)


# ----------------------------------------------------------------------------
# Generation-aware tiling budget.
# ----------------------------------------------------------------------------
def _per_buffer_tile_bytes():
    """Per-buffer tile budget (bytes).

    VMEM cost ~= 3 arrays (x, pe, out) x 2 pipeline buffers x tile, so keep
    ~6x tile comfortably inside physical VMEM per TensorCore:
      v7x     :  64 MiB physical -> 4 MiB tiles (~24 MiB + headroom)
      v6e/v5p : 128 MiB physical -> 8 MiB tiles (~48 MiB, limit raised below)
      v5e     : HBM ~0.8 TB/s; at 2 MiB tiles the ~0.35 us fixed per-step
                overhead is already <10%, so prefer headroom over bigger tiles.
    """
    try:
        kind = jax.devices()[0].device_kind.lower()
    except Exception:
        kind = ""
    if "v7" in kind or "7x" in kind:
        return 4 << 20
    if "v6" in kind or "v5p" in kind:
        return 8 << 20
    return 2 << 20   # v5e / unknown: conservative


def positional_encoding_forward(x, pe_table):
    """Eval-mode forward: x + pe[:S] broadcast over batch (dropout == identity).

    x        : (B, S, D)
    pe_table : (max_len, D) positional-encoding table (kept fp32).
    """
    b, s, d = x.shape
    max_len, d_pe = pe_table.shape
    assert d_pe == d and s <= max_len

    out_dtype = jnp.promote_types(x.dtype, pe_table.dtype)
    x_isz = jnp.dtype(x.dtype).itemsize
    pe_isz = jnp.dtype(pe_table.dtype).itemsize
    o_isz = jnp.dtype(out_dtype).itemsize

    # ---- Lane-dense layout: flatten (S, D) -> rows of 128 lanes, padding the
    # flattened length up to a multiple of 128 so stores are never masked.
    sd = s * d
    pad = (-sd) % LANE
    r_total = (sd + pad) // LANE
    row_bytes = LANE * max(x_isz, pe_isz, o_isz)

    if pad:
        x_flat = jnp.pad(x.reshape(b, sd), ((0, 0), (0, pad))).reshape(b, r_total, LANE)
        pe_exact = jnp.pad(pe_table[:s].reshape(sd), (0, pad)).reshape(r_total, LANE)
        full_table_ok = False
    else:
        x_flat = x.reshape(b, r_total, LANE)
        pe_exact = None
        full_table_ok = (max_len * d) % LANE == 0

    per_buf = _per_buffer_tile_bytes()
    vmem_limit = int(min(10 * per_buf, 100 << 20))

    cost = pl.CostEstimate(
        flops=b * r_total * LANE,                                   # one add / element
        transcendentals=0,
        bytes_accessed=b * r_total * LANE * (x_isz + o_isz) + r_total * LANE * pe_isz,
    )

    if r_total * row_bytes <= per_buf:
        # ------------------------------------------------------------------
        # Small S*D: fold batch rows into the block. The whole pe slab is one
        # (r_total, 128) block fetched once; x/out blocks carry b_blk batch
        # rows so per-step DMA stays large.
        # ------------------------------------------------------------------
        b_blk = max(1, per_buf // (r_total * row_bytes))
        b_blk = min(b_blk, b)
        if b >= 2:
            # keep >= 2 grid steps so v7x's two TensorCores both get work
            b_blk = min(b_blk, pl.cdiv(b, 2))
        n_b = pl.cdiv(b, b_blk)

        if full_table_ok and r_total % 8 == 0:
            pe_rows = pe_table.reshape(-1, LANE)        # free reshape, no copy
        else:
            # block must equal the full pe extent when r_total % 8 != 0
            pe_rows = pe_exact if pe_exact is not None else pe_table[:s].reshape(r_total, LANE)

        out_flat = pl.pallas_call(
            _pe_add_kernel,
            out_shape=jax.ShapeDtypeStruct((b, r_total, LANE), out_dtype),
            grid=(n_b,),
            in_specs=[
                pl.BlockSpec((b_blk, r_total, LANE), lambda bi: (bi, 0, 0)),   # x
                pl.BlockSpec((r_total, LANE), lambda bi: (0, 0)),              # pe (shared)
            ],
            out_specs=pl.BlockSpec((b_blk, r_total, LANE), lambda bi: (bi, 0, 0)),
            compiler_params=pltpu.CompilerParams(
                dimension_semantics=("parallel",),
                vmem_limit_bytes=vmem_limit,
            ),
            cost_estimate=cost,
        )(x_flat, pe_rows)
    else:
        # ------------------------------------------------------------------
        # Large S*D: tile the 128-lane rows. Seq-tile axis OUTER, batch INNER
        # -> the pe tile's block index is constant across consecutive steps,
        # so its re-DMA is skipped per batch row.
        # ------------------------------------------------------------------
        tr = max(_ROW_QUANTUM, (per_buf // row_bytes) // _ROW_QUANTUM * _ROW_QUANTUM)
        tr = min(tr, r_total)
        n_tiles = pl.cdiv(r_total, tr)

        if full_table_ok:
            # Full-table reshape (no copy). A partial last tile may read pe
            # rows past position s; those rows are valid table entries (or
            # masked by Pallas at the array end) and the corresponding output
            # rows are never written back, so this is safe. Keep it that way
            # if this ever moves to manual DMA.
            pe_rows = pe_table.reshape(-1, LANE)
        else:
            pe_rows = pe_exact if pe_exact is not None else pe_table[:s].reshape(r_total, LANE)

        out_flat = pl.pallas_call(
            _pe_add_kernel,
            out_shape=jax.ShapeDtypeStruct((b, r_total, LANE), out_dtype),
            grid=(n_tiles, b),
            in_specs=[
                pl.BlockSpec((1, tr, LANE), lambda t, bi: (bi, t, 0)),   # x
                pl.BlockSpec((tr, LANE), lambda t, bi: (t, 0)),          # pe (shared)
            ],
            out_specs=pl.BlockSpec((1, tr, LANE), lambda t, bi: (bi, t, 0)),
            compiler_params=pltpu.CompilerParams(
                dimension_semantics=("parallel", "parallel"),
                vmem_limit_bytes=vmem_limit,
            ),
            cost_estimate=cost,
        )(x_flat, pe_rows)

    if pad:
        out = out_flat.reshape(b, r_total * LANE)[:, :sd].reshape(b, s, d)
    else:
        out = out_flat.reshape(b, s, d)
    return out


# ----------------------------------------------------------------------------
# Parameter setup (mirrors PositionalEncoding.__init__): deterministic pe table
# built once, kept in fp32 (the in-kernel add promotes, matching PyTorch).
# ----------------------------------------------------------------------------
def make_pe_table(d_model, max_len=5000, dtype=jnp.float32):
    position = jnp.arange(0.0, max_len, dtype=jnp.float32)[:, None]            # (L, 1)
    div_term = jnp.exp(
        jnp.arange(0.0, d_model, 2.0, dtype=jnp.float32)
        * -(math.log(10000.0) / d_model)
    )                                                                           # (D/2,)
    pe_pos = position * div_term                                                # (L, D/2)
    pe = jnp.zeros((max_len, d_model), dtype=jnp.float32)
    pe = pe.at[:, 0::2].set(jnp.sin(pe_pos))
    pe = pe.at[:, 1::2].set(jnp.cos(pe_pos))
    return pe.astype(dtype)


if __name__ == "__main__":
    # Small shapes consistent with the module's forward: (batch, seq, d_model)
    batch, seq, d_model = 2, 8, 32
    dropout_p = 0.1            # nn.Dropout(p) == identity at inference (eval mode)
    max_len = 5000

    key = jax.random.PRNGKey(0)
    x = jax.random.normal(key, (batch, seq, d_model), dtype=jnp.float32)

    pe_table = make_pe_table(d_model, max_len=max_len, dtype=jnp.float32)

    out = jax.block_until_ready(positional_encoding_forward(x, pe_table))

    # Reference check in plain JAX (same math as the PyTorch forward, eval mode)
    ref = x + pe_table[None, :seq, :]
    assert out.shape == (batch, seq, d_model)
    assert out.dtype == ref.dtype
    assert jnp.allclose(out, ref, atol=1e-6, rtol=1e-6)

    print("KERNEL_OK")
</pallas_src>

<mosaic_0001>
module attributes {stable_mosaic.version = 11 : i64} {
  func.func @_pe_add_kernel(%arg0: i32, %arg1: memref<1x2x128xf32, #tpu.memory_space<vmem>>, %arg2: memref<2x128xf32, #tpu.memory_space<vmem>>, %arg3: memref<1x2x128xf32, #tpu.memory_space<vmem>>) attributes {dimension_semantics = [#tpu.dimension_semantics<parallel>], iteration_bounds = array<i64: 2>, scalar_prefetch = 0 : i64, scratch_operands = 0 : i64, tpu.core_type = #tpu.core_type<tc>, window_params = [{transform_indices = @transform_0, window_bounds = array<i64: 1, 2, 128>}, {pipeline_mode = #tpu.pipeline_mode<synchronous>, transform_indices = @transform_1, window_bounds = array<i64: 2, 128>}, {transform_indices = @transform_2, window_bounds = array<i64: 1, 2, 128>}]} {
    %c0 = arith.constant 0 : index
    %c0_0 = arith.constant 0 : index
    %c0_1 = arith.constant 0 : index
    %0 = vector.load %arg1[%c0, %c0_0, %c0_1] : memref<1x2x128xf32, #tpu.memory_space<vmem>>, vector<1x2x128xf32>
    %c0_2 = arith.constant 0 : index
    %c0_3 = arith.constant 0 : index
    %1 = vector.load %arg2[%c0_2, %c0_3] : memref<2x128xf32, #tpu.memory_space<vmem>>, vector<2x128xf32>
    %2 = vector.shape_cast %1 : vector<2x128xf32> to vector<1x2x128xf32>
    %3 = arith.addf %0, %2 : vector<1x2x128xf32>
    %c0_4 = arith.constant 0 : index
    %c0_5 = arith.constant 0 : index
    %c0_6 = arith.constant 0 : index
    %4 = vector.load %arg3[%c0_4, %c0_5, %c0_6] : memref<1x2x128xf32, #tpu.memory_space<vmem>>, vector<1x2x128xf32>
    tpu.vector_store %arg3[%c0_4, %c0_5, %c0_6], %3 {strides = array<i32>} : memref<1x2x128xf32, #tpu.memory_space<vmem>>, vector<1x2x128xf32>,
    return
  }
  func.func @transform_0(%arg0: i32) -> (i32, i32, i32) {
    %c0_i32 = arith.constant 0 : i32
    %c0_i32_0 = arith.constant 0 : i32
    %c0_i32_1 = arith.constant 0 : i32
    return %arg0, %c0_i32, %c0_i32_0 : i32, i32, i32
  }
  func.func @transform_1(%arg0: i32) -> (i32, i32) {
    %c0_i32 = arith.constant 0 : i32
    %c0_i32_0 = arith.constant 0 : i32
    %c0_i32_1 = arith.constant 0 : i32
    return %c0_i32, %c0_i32_0 : i32, i32
  }
  func.func @transform_2(%arg0: i32) -> (i32, i32, i32) {
    %c0_i32 = arith.constant 0 : i32
    %c0_i32_0 = arith.constant 0 : i32
    %c0_i32_1 = arith.constant 0 : i32
    return %arg0, %c0_i32, %c0_i32_0 : i32, i32, i32
  }
}

</mosaic_0001>

<llo_original>
// kernel: tpu_custom_call.1
$region0: #{tpu_custom_call.1}
  #allocation0 [shape = 'u32[]', space=smem, size = 0x4, offset = 0x4, fixed_abs, tag = 'smem constant byte address 0x4 - core index']
  #allocation1 [shape = 'u32[144,128]{1,0:T(1,128)}', space=vmem, size = 0x12000, scoped, tag = 'internal scratch']
  %s0 = inlined_call_operand.hbm [shape: f32[2,2,128], index: 0, kind: input, shape index: {}]
  %s1 = inlined_call_operand.vmem [shape: f32[2,128], index: 1, kind: input, shape index: {}]
  %s2 = inlined_call_operand.hbm [shape: f32[2,2,128], index: 2, kind: output, shape index: {}]
  %s3 = sld [smem:[#allocation0]]
  $region45: #{tpu_custom_call.1} parent=0
    _
  %s5 = ssub.s32 1, %s3
  %s6 = scalar_select 0, %s5, %s3
  $region1: #{tpu_custom_call.1} parent=0
    #allocation2 [shape = 'u8[2048]{0}', space=vmem, size = 0x800, scoped, tag = 'input window, operand 0']
    #allocation3 [shape = 's32[2]{0}', space=sflag, size = 0x8, scoped, tag = 'scoped memory for tpu_custom_call.1']
    #allocation4 [shape = 's32[2]{0}', space=sflag, size = 0x8, scoped, tag = 'scoped memory for tpu_custom_call.1']
    #allocation5 [shape = 'u8[2048]{0}', space=vmem, size = 0x800, scoped, tag = 'output window, operand 0']
    %7 = vsyncpa [#allocation3], 0
    %s8 = scalar_lea.sflag [#allocation3], 1
    %9 = vsyncpa %s8, 0
    %10 = vsyncpa [#allocation4], 0
    %s11 = scalar_lea.sflag [#allocation4], 1
    %12 = vsyncpa %s11, 0
    loop: start=0, step=1, limit=4
    $region2: #{tpu_custom_call.1} parent=1 // loop_pre_header
      _
    $region3: #{tpu_custom_call.1} parent=1 // loop_header
      %s14 = sphi 0, %s18
      %p15 = scmp.ge.s32.totalorder %s14, 4
      %s24 = sphi 0, %s26
      %s27 = sphi 0, %s24
      %s28 = sphi 0, %s27
      %s44 = sphi 0, %s28
      %s48 = sphi 0, %s48
      %s50 = sphi 0, %s48
      %s51 = sphi 0, %s50
      %s65 = sphi 0, %s51
      %s71 = sphi 0, %s73
      %s74 = sphi 0, %s71
      %s75 = sphi 0, %s74
      %s91 = sphi 0, %s75
    $region4: #{tpu_custom_call.1} parent=1 // loop_header_branch
      %17 = sbr.rel (%p15) target = $region8
    $region5: #{tpu_custom_call.1} parent=1 // loop_body
      %s19 = ssub.s32 %s14, 1
      %s20 = ssub.s32 %s14, 2
      %s21 = sadd.s32 %s14, 1
      %s22 = ssub.s32 %s14, %s21
      %p23 = scmp.eq.s32.totalorder %s22, 0
      %s25 = sadd.s32 %s24, 1
      %s26 = scalar_select %p23, %s24, %s25
      %p29 = pneg %p23
      %p30 = scmp.eq.s32.totalorder %s14, 1
      %p31 = por %p29, %p30
      %p32 = scmp.ne.s32.totalorder %s24, %s27
      %p33 = scmp.eq.s32.totalorder %s14, 0
      %p34 = por %p32, %p33
      %p35 = scmp.ne.s32.totalorder %s24, %s27
      %p36 = scmp.eq.s32.totalorder %s19, 1
      %p37 = por %p35, %p36
      %p38 = scmp.ne.s32.totalorder %s27, %s28
      %p39 = scmp.eq.s32.totalorder %s19, 0
      %p40 = por %p38, %p39
      %p41 = scmp.ne.s32.totalorder %s27, %s28
      %p42 = scmp.eq.s32.totalorder %s20, 1
      %p43 = por %p41, %p42
      %p45 = scmp.ne.s32.totalorder %s28, %s44
      %p46 = scmp.eq.s32.totalorder %s20, 0
      %p47 = por %p45, %p46
      %s49 = sadd.s32 %s48, 1
      %p52 = scmp.eq.s32.totalorder %s14, 1
      %p53 = scmp.ne.s32.totalorder %s48, %s50
      %p54 = scmp.eq.s32.totalorder %s14, 0
      %p55 = por %p53, %p54
      %p56 = scmp.ne.s32.totalorder %s48, %s50
      %p57 = scmp.eq.s32.totalorder %s19, 1
      %p58 = por %p56, %p57
      %p59 = scmp.ne.s32.totalorder %s50, %s51
      %p60 = scmp.eq.s32.totalorder %s19, 0
      %p61 = por %p59, %p60
      %p62 = scmp.ne.s32.totalorder %s50, %s51
      %p63 = scmp.eq.s32.totalorder %s20, 1
      %p64 = por %p62, %p63
      %p66 = scmp.ne.s32.totalorder %s51, %s65
      %p67 = scmp.eq.s32.totalorder %s20, 0
      %p68 = por %p66, %p67
      %s69 = ssub.s32 %s14, %s21
      %p70 = scmp.eq.s32.totalorder %s69, 0
      %s72 = sadd.s32 %s71, 1
      %s73 = scalar_select %p70, %s71, %s72
      %p76 = pneg %p70
      %p77 = scmp.eq.s32.totalorder %s14, 1
      %p78 = por %p76, %p77
      %p79 = scmp.ne.s32.totalorder %s71, %s74
      %p80 = scmp.eq.s32.totalorder %s14, 0
      %p81 = por %p79, %p80
      %p82 = scmp.ne.s32.totalorder %s71, %s74
      %p83 = scmp.eq.s32.totalorder %s19, 1
      %p84 = por %p82, %p83
      %p85 = scmp.ne.s32.totalorder %s74, %s75
      %p86 = scmp.eq.s32.totalorder %s19, 0
      %p87 = por %p85, %p86
      %p88 = scmp.ne.s32.totalorder %s74, %s75
      %p89 = scmp.eq.s32.totalorder %s20, 1
      %p90 = por %p88, %p89
      %p92 = scmp.ne.s32.totalorder %s75, %s91
      %p93 = scmp.eq.s32.totalorder %s20, 0
      %p94 = por %p92, %p93
      %p95 = scmp.le.s32.totalorder 1, %s14
      %p96 = scmp.lt.s32.totalorder %s14, 3
      %p97 = pnand %p95, %p96
      %p98 = pneg %p97
      // Predicated region
      $region9: #{tpu_custom_call.1} parent=5 // pred_check
        _
      $region10: #{tpu_custom_call.1} parent=5 // pred_check_branch
        %100 = sbr.rel (%p97) target = $region12
      $region11: #{tpu_custom_call.1} parent=5 // pred_region
        %s101 = ssub.s32 %s14, 1
        // Predicated region
        $region13: #{tpu_custom_call.1} parent=11 // pred_check
          %p102 = pneg %p61
        $region14: #{tpu_custom_call.1} parent=11 // pred_check_branch
          %104 = sbr.rel (%p102) target = $region16
        $region15: #{tpu_custom_call.1} parent=11 // pred_region
          _
        $region16: #{tpu_custom_call.1} parent=11 // pred_fallthru
          _
      $region12: #{tpu_custom_call.1} parent=5 // pred_fallthru
        _
      %p105 = scmp.lt.s32.totalorder %s14, 2
      // Predicated region
      $region17: #{tpu_custom_call.1} parent=5 // pred_check
        %p106 = pneg %p105
      $region18: #{tpu_custom_call.1} parent=5 // pred_check_branch
        %108 = sbr.rel (%p106) target = $region20
      $region19: #{tpu_custom_call.1} parent=5 // pred_region
        // Predicated region
        $region21: #{tpu_custom_call.1} parent=19 // pred_check
          %p109 = pneg %p34
        $region22: #{tpu_custom_call.1} parent=19 // pred_check_branch
          %111 = sbr.rel (%p109) target = $region24
        $region23: #{tpu_custom_call.1} parent=19 // pred_region
          %s112 = sand.u32 %s24, 1
          %s113 = scalar_lea.sflag [#allocation3], %s112
          %s114 = sand.u32 %s24, 1
          %s115 = smul.addr %s114, 2
          %s116 = scalar_lea.vmem [#allocation2], %s115
          %s118 = ssub.s32 32, 32
          %119 = vsyncadd %s113, %s118
          %s120 = smul.addr %s14, 32
          %s121 = scalar_lea.hbm %s0, %s120
          %s123 = sshll.u32 %s116, 4
          %s124 = int_to_ptr.vmem [resolvable:$true] %s123
          %126 = dma.hbm_to_vmem [thread:$0]  %s121, 32, %s124, %s113
        $region24: #{tpu_custom_call.1} parent=19 // pred_fallthru
          _
      $region20: #{tpu_custom_call.1} parent=5 // pred_fallthru
        _
      %p127 = scmp.le.s32.totalorder 1, %s14
      %p128 = scmp.lt.s32.totalorder %s14, 3
      %p129 = pnand %p127, %p128
      %p130 = pneg %p129
      // Predicated region
      $region25: #{tpu_custom_call.1} parent=5 // pred_check
        _
      $region26: #{tpu_custom_call.1} parent=5 // pred_check_branch
        %132 = sbr.rel (%p129) target = $region28
      $region27: #{tpu_custom_call.1} parent=5 // pred_region
        %s133 = ssub.s32 %s14, 1
        %s134 = sand.u32 %s27, 1
        %s135 = scalar_lea.sflag [#allocation3], %s134
        %s136 = sand.u32 %s27, 1
        %s137 = smul.addr %s136, 2
        %s138 = scalar_lea.vmem [#allocation2], %s137
        // Predicated region
        $region29: #{tpu_custom_call.1} parent=27 // pred_check
          %p139 = pneg %p40
        $region30: #{tpu_custom_call.1} parent=27 // pred_check_branch
          %141 = sbr.rel (%p139) target = $region32
        $region31: #{tpu_custom_call.1} parent=27 // pred_region
          %142 = dma.done %s135, 32
        $region32: #{tpu_custom_call.1} parent=27 // pred_fallthru
          _
        %s143 = sand.u32 %s27, 1
        %s144 = scalar_lea.sflag [#allocation3], %s143
        %s145 = sand.u32 %s27, 1
        %s146 = smul.addr %s145, 2
        %s147 = scalar_lea.vmem [#allocation2], %s146
        %p148 = pneg %p40
        %p149 = pneg %p37
        %p150 = pneg %p61
        %p151 = pneg %p58
        %p152 = pneg %p87
        %p153 = pneg %p84
        %s154 = sand.u32 %s74, 1
        %s155 = scalar_lea.sflag [#allocation4], %s154
        %s156 = sand.u32 %s74, 1
        %s157 = smul.addr %s156, 2
        %s158 = scalar_lea.vmem [#allocation5], %s157
        %v159 = vld [vmem:[%s138] sm:$0x3]
        %v160 = vld [vmem:[%s1] sm:$0x3]
        %v161 = vadd.f32 %v159, %v160
        %162 = vst [vmem:[%s158] sm:$0x3] %v161
        %s163 = sand.u32 %s74, 1
        %s164 = scalar_lea.sflag [#allocation4], %s163
        %s165 = sand.u32 %s74, 1
        %s166 = smul.addr %s165, 2
        %s167 = scalar_lea.vmem [#allocation5], %s166
        // Predicated region
        $region33: #{tpu_custom_call.1} parent=27 // pred_check
          %p168 = pneg %p84
        $region34: #{tpu_custom_call.1} parent=27 // pred_check_branch
          %170 = sbr.rel (%p168) target = $region36
        $region35: #{tpu_custom_call.1} parent=27 // pred_region
          %s172 = ssub.s32 32, 32
          %173 = vsyncadd %s164, %s172
          %s174 = smul.addr %s19, 32
          %s175 = scalar_lea.hbm %s2, %s174
          %s177 = sshll.u32 %s167, 4
          %s178 = int_to_ptr.vmem [resolvable:$true] %s177
          %180 = dma.vmem_to_hbm [thread:$0]  %s178, 32, %s175, %s164
        $region36: #{tpu_custom_call.1} parent=27 // pred_fallthru
          _
      $region28: #{tpu_custom_call.1} parent=5 // pred_fallthru
        _
      %p181 = scmp.le.s32.totalorder 2, %s14
      // Predicated region
      $region37: #{tpu_custom_call.1} parent=5 // pred_check
        %p182 = pneg %p181
      $region38: #{tpu_custom_call.1} parent=5 // pred_check_branch
        %184 = sbr.rel (%p182) target = $region40
      $region39: #{tpu_custom_call.1} parent=5 // pred_region
        %s185 = ssub.s32 %s14, 2
        // Predicated region
        $region41: #{tpu_custom_call.1} parent=39 // pred_check
          %p186 = pneg %p90
        $region42: #{tpu_custom_call.1} parent=39 // pred_check_branch
          %188 = sbr.rel (%p186) target = $region44
        $region43: #{tpu_custom_call.1} parent=39 // pred_region
          %s189 = sand.u32 %s75, 1
          %s190 = scalar_lea.sflag [#allocation4], %s189
          %s191 = sand.u32 %s75, 1
          %s192 = smul.addr %s191, 2
          %s193 = scalar_lea.vmem [#allocation5], %s192
          %194 = dma.done %s190, 32
        $region44: #{tpu_custom_call.1} parent=39 // pred_fallthru
          _
      $region40: #{tpu_custom_call.1} parent=5 // pred_fallthru
        _
    $region6: #{tpu_custom_call.1} parent=1 // loop_footer
      %s18 = sadd.s32 1, %s14
    $region7: #{tpu_custom_call.1} parent=1 // loop_footer_branch
      %13 = sbr.rel target = $region3
    $region8: #{tpu_custom_call.1} parent=1 // loop_exit
      _
    %195 = vsyncpa [#allocation3], 1
    %s196 = scalar_lea.sflag [#allocation3], 1
    %197 = vsyncpa %s196, 1
    %198 = vsyncpa [#allocation4], 1
    %s199 = scalar_lea.sflag [#allocation4], 1
    %200 = vsyncpa %s199, 1

</llo_original>
